<compile_context>
chip_gen: v6e
topology: v6e:2x2x1
jax: 0.10.0
libtpu: 0.0.40
codegen_flags: <defaults>
</compile_context>

<pallas_src>
import jax
import jax.numpy as jnp
from jax.experimental import pallas as pl
from jax.experimental.pallas import tpu as pltpu


def _round_up(x, m):
    return (x + m - 1) // m * m


def _vmem_limit_bytes():
    """Generation-aware scoped-VMEM request: <= half of physical, <= 32 MiB."""
    cap = 64 << 20  # conservative fallback (v7x per-TC capacity)
    try:
        info = pltpu.get_tpu_info()
        cap = int(getattr(info, "vmem_capacity_bytes", cap))
    except Exception:
        pass
    return min(32 << 20, cap // 2)


def _choose_row_tile(N, F, budget_bytes):
    """Pick a row-tile size (multiple of 8) fitting the VMEM budget while
    keeping >= ~8 grid steps when N is large enough (pipelining + megacore)."""
    row_bytes = _round_up(F, 128) * 4          # f32 VMEM footprint per row
    param_bytes = 4 * row_bytes                # 2 x double-buffered (1,F) g/b
    avail = max(budget_bytes - param_bytes, 4 * 8 * row_bytes)
    tn = avail // (4 * row_bytes)              # 2 in bufs + 2 out bufs
    tn = max(8, (tn // 8) * 8)
    tn = min(tn, max(8, _round_up(pl.cdiv(N, 8), 8)))
    return int(tn)
    # TODO(synk): for huge F (F >~ 230K on v5e) even an 8-row tile can exceed
    # the scoped VMEM limit; that needs a second "arbitrary" grid axis over F
    # with partial-sum scratch — not implemented here.


def _make_layernorm_kernel(eps, f_real):
    """Per-tile kernel; eps and feature count are static constants."""
    inv_count = 1.0 / float(f_real)
    inv_ddof = 1.0 / float(max(f_real - 1, 1))   # torch.std default: unbiased

    def kernel(x_ref, g_ref, b_ref, out_ref):
        x = x_ref[...].astype(jnp.float32)                   # (TN, F)

        mean = jnp.sum(x, axis=1, keepdims=True) * inv_count  # (TN, 1)
        diff = x - mean
        var = jnp.sum(diff * diff, axis=1, keepdims=True) * inv_ddof
        std = jnp.sqrt(var)
        # One reciprocal per row, then broadcast VPU multiplies instead of
        # F per-element divides per row.
        inv = pl.reciprocal(std + eps, approx=False)          # (TN, 1)

        y = diff * inv
        y = g_ref[...].astype(jnp.float32) * y + b_ref[...].astype(jnp.float32)
        out_ref[...] = y.astype(out_ref.dtype)

    return kernel


def layer_norm(x, gamma, beta, eps=1e-5, affine=True):
    """x: (N, C, H, W); gamma/beta: (C,).  Returns (N, C, H, W), dtype of x."""
    N, C, H, W = x.shape
    F = C * H * W
    x2d = x.reshape(N, F)

    # Per-channel gamma/beta broadcast over H*W into length-F rows.
    # TODO(synk): these rows only change on parameter updates — cache them
    # outside the per-call path when used in a training loop.
    if affine:
        g_row = jnp.broadcast_to(gamma.astype(jnp.float32)[:, None],
                                 (C, H * W)).reshape(1, F)
        b_row = jnp.broadcast_to(beta.astype(jnp.float32)[:, None],
                                 (C, H * W)).reshape(1, F)
    else:
        g_row = jnp.ones((1, F), jnp.float32)
        b_row = jnp.zeros((1, F), jnp.float32)

    vmem_limit = _vmem_limit_bytes()
    budget = min(20 << 20, vmem_limit * 5 // 8)
    tn = _choose_row_tile(N, F, budget)

    kernel = _make_layernorm_kernel(float(eps), F)

    out2d = pl.pallas_call(
        kernel,
        out_shape=jax.ShapeDtypeStruct((N, F), x.dtype),
        grid=(pl.cdiv(N, tn),),
        in_specs=[
            # Last block dim == full F (legal for any F); boundary row tiles
            # are masked on store — rows are independent, so garbage reads in
            # the OOB tail only feed discarded outputs.
            pl.BlockSpec((tn, F), lambda i: (i, 0)),   # x row tile
            pl.BlockSpec((1, F), lambda i: (0, 0)),    # gamma row (resident)
            pl.BlockSpec((1, F), lambda i: (0, 0)),    # beta row (resident)
        ],
        out_specs=pl.BlockSpec((tn, F), lambda i: (i, 0)),
        compiler_params=pltpu.CompilerParams(
            dimension_semantics=("parallel",),         # megacore on v7x
            vmem_limit_bytes=vmem_limit,
        ),
    )(x2d, g_row, b_row)

    return out2d.reshape(N, C, H, W)


if __name__ == "__main__":
    key = jax.random.PRNGKey(0)
    kx, kg = jax.random.split(key)

    N, C, H, W = 2, 4, 16, 16
    x = jax.random.normal(kx, (N, C, H, W), dtype=jnp.float32)

    # Deterministic parameter init mirroring nn.Parameter(torch.Tensor(C).uniform_())
    gamma = jax.random.uniform(kg, (C,), dtype=jnp.float32)
    beta = jnp.zeros((C,), dtype=jnp.float32)

    y = layer_norm(x, gamma, beta, eps=1e-5, affine=True)
    jax.block_until_ready(y)

    # Pure-JAX reference (same semantics as the PyTorch forward)
    xf = x.reshape(N, -1)
    mean = xf.mean(axis=1).reshape(N, 1, 1, 1)
    std = jnp.sqrt(((xf - xf.mean(axis=1, keepdims=True)) ** 2).sum(axis=1)
                   / (xf.shape[1] - 1)).reshape(N, 1, 1, 1)
    ref = (x - mean) / (std + 1e-5)
    ref = gamma.reshape(1, C, 1, 1) * ref + beta.reshape(1, C, 1, 1)
    assert jnp.allclose(y, ref, atol=1e-5, rtol=1e-5), "mismatch vs reference"

    print("KERNEL_OK")
</pallas_src>

<mosaic_0001>
module attributes {stable_mosaic.version = 11 : i64} {
  func.func @kernel(%arg0: i32, %arg1: memref<8x1024xf32, #tpu.memory_space<vmem>>, %arg2: memref<1x1024xf32, #tpu.memory_space<vmem>>, %arg3: memref<1x1024xf32, #tpu.memory_space<vmem>>, %arg4: memref<8x1024xf32, #tpu.memory_space<vmem>>) attributes {dimension_semantics = [#tpu.dimension_semantics<parallel>], iteration_bounds = array<i64: 1>, scalar_prefetch = 0 : i64, scratch_operands = 0 : i64, tpu.core_type = #tpu.core_type<tc>, window_params = [{transform_indices = @transform_0, window_bounds = array<i64: 8, 1024>}, {pipeline_mode = #tpu.pipeline_mode<synchronous>, transform_indices = @transform_1, window_bounds = array<i64: 1, 1024>}, {pipeline_mode = #tpu.pipeline_mode<synchronous>, transform_indices = @transform_2, window_bounds = array<i64: 1, 1024>}, {transform_indices = @transform_3, window_bounds = array<i64: 8, 1024>}]} {
    %c0 = arith.constant 0 : index
    %c0_0 = arith.constant 0 : index
    %0 = vector.load %arg1[%c0, %c0_0] : memref<8x1024xf32, #tpu.memory_space<vmem>>, vector<8x1024xf32>
    %cst = arith.constant dense<0.000000e+00> : vector<8xf32>
    %1 = vector.multi_reduction <add>, %0, %cst [1] : vector<8x1024xf32> to vector<8xf32>
    %2 = vector.shape_cast %1 : vector<8xf32> to vector<8x1xf32>
    %cst_1 = arith.constant 9.765625E-4 : f32
    %3 = vector.broadcast %cst_1 : f32 to vector<8x1xf32>
    %4 = arith.mulf %2, %3 : vector<8x1xf32>
    %5 = vector.broadcast %4 : vector<8x1xf32> to vector<8x1024xf32>
    %6 = arith.subf %0, %5 : vector<8x1024xf32>
    %7 = arith.mulf %6, %6 : vector<8x1024xf32>
    %cst_2 = arith.constant dense<0.000000e+00> : vector<8xf32>
    %8 = vector.multi_reduction <add>, %7, %cst_2 [1] : vector<8x1024xf32> to vector<8xf32>
    %9 = vector.shape_cast %8 : vector<8xf32> to vector<8x1xf32>
    %cst_3 = arith.constant 9.77517105E-4 : f32
    %10 = vector.broadcast %cst_3 : f32 to vector<8x1xf32>
    %11 = arith.mulf %9, %10 : vector<8x1xf32>
    %12 = math.sqrt %11 : vector<8x1xf32>
    %cst_4 = arith.constant 9.99999974E-6 : f32
    %13 = vector.broadcast %cst_4 : f32 to vector<8x1xf32>
    %14 = arith.addf %12, %13 : vector<8x1xf32>
    %15 = tpu.reciprocal %14 : vector<8x1xf32> -> vector<8x1xf32>
    %16 = vector.broadcast %15 : vector<8x1xf32> to vector<8x1024xf32>
    %17 = arith.mulf %6, %16 : vector<8x1024xf32>
    %c0_5 = arith.constant 0 : index
    %c0_6 = arith.constant 0 : index
    %18 = vector.load %arg2[%c0_5, %c0_6] : memref<1x1024xf32, #tpu.memory_space<vmem>>, vector<1x1024xf32>
    %19 = vector.broadcast %18 : vector<1x1024xf32> to vector<8x1024xf32>
    %20 = arith.mulf %19, %17 : vector<8x1024xf32>
    %c0_7 = arith.constant 0 : index
    %c0_8 = arith.constant 0 : index
    %21 = vector.load %arg3[%c0_7, %c0_8] : memref<1x1024xf32, #tpu.memory_space<vmem>>, vector<1x1024xf32>
    %22 = vector.broadcast %21 : vector<1x1024xf32> to vector<8x1024xf32>
    %23 = arith.addf %20, %22 : vector<8x1024xf32>
    %c0_9 = arith.constant 0 : index
    %c0_10 = arith.constant 0 : index
    %24 = vector.load %arg4[%c0_9, %c0_10] : memref<8x1024xf32, #tpu.memory_space<vmem>>, vector<8x1024xf32>
    tpu.vector_store %arg4[%c0_9, %c0_10], %23 {strides = array<i32>} : memref<8x1024xf32, #tpu.memory_space<vmem>>, vector<8x1024xf32>,
    return
  }
  func.func @transform_0(%arg0: i32) -> (i32, i32) {
    %c0_i32 = arith.constant 0 : i32
    %c0_i32_0 = arith.constant 0 : i32
    return %arg0, %c0_i32 : i32, i32
  }
  func.func @transform_1(%arg0: i32) -> (i32, i32) {
    %c0_i32 = arith.constant 0 : i32
    %c0_i32_0 = arith.constant 0 : i32
    %c0_i32_1 = arith.constant 0 : i32
    return %c0_i32, %c0_i32_0 : i32, i32
  }
  func.func @transform_2(%arg0: i32) -> (i32, i32) {
    %c0_i32 = arith.constant 0 : i32
    %c0_i32_0 = arith.constant 0 : i32
    %c0_i32_1 = arith.constant 0 : i32
    return %c0_i32, %c0_i32_0 : i32, i32
  }
  func.func @transform_3(%arg0: i32) -> (i32, i32) {
    %c0_i32 = arith.constant 0 : i32
    %c0_i32_0 = arith.constant 0 : i32
    return %arg0, %c0_i32 : i32, i32
  }
}

</mosaic_0001>

<llo_original>
// kernel: tpu_custom_call.1
$region0: #{tpu_custom_call.1}
  #allocation0 [shape = 'u32[]', space=smem, size = 0x4, offset = 0x4, fixed_abs, tag = 'smem constant byte address 0x4 - core index']
  #allocation1 [shape = 'u32[144,128]{1,0:T(1,128)}', space=vmem, size = 0x12000, scoped, tag = 'internal scratch']
  %s0 = inlined_call_operand.hbm [shape: f32[2,1024], index: 0, kind: input, shape index: {}]
  %s1 = inlined_call_operand.hbm [shape: f32[1,1024], index: 1, kind: input, shape index: {}]
  %s2 = inlined_call_operand.hbm [shape: f32[1,1024], index: 2, kind: input, shape index: {}]
  %s3 = inlined_call_operand.hbm [shape: f32[2,1024], index: 3, kind: output, shape index: {}]
  %s4 = sld [smem:[#allocation0]]
  $region34: #{tpu_custom_call.1} parent=0
    _
  %s6 = ssub.s32 1, %s4
  %s7 = scalar_select 0, %s6, %s4
  $region1: #{tpu_custom_call.1} parent=0
    #allocation2 [shape = 'u8[32768]{0}', space=vmem, size = 0x8000, scoped, tag = 'input window, operand 0, single buffered']
    #allocation3 [shape = 's32[1]{0}', space=sflag, size = 0x4, scoped, tag = 'scoped memory for tpu_custom_call.1']
    #allocation4 [shape = 's32[1]{0}', space=sflag, size = 0x4, scoped, tag = 'scoped memory for tpu_custom_call.1']
    #allocation5 [shape = 'u8[4096]{0}', space=vmem, size = 0x1000, scoped, tag = 'input window, operand 1, single buffered']
    #allocation6 [shape = 's32[1]{0}', space=sflag, size = 0x4, scoped, tag = 'scoped memory for tpu_custom_call.1']
    #allocation7 [shape = 'u8[4096]{0}', space=vmem, size = 0x1000, scoped, tag = 'input window, operand 2, single buffered']
    #allocation8 [shape = 'u8[32768]{0}', space=vmem, size = 0x8000, scoped, tag = 'output window, operand 0, single buffered']
    %8 = vsyncpa [#allocation3], 0
    %9 = vsyncpa [#allocation6], 0
    %10 = vsyncpa [#allocation4], 0
    // Predicated region
    $region2: #{tpu_custom_call.1} parent=1 // pred_check
      _
    $region3: #{tpu_custom_call.1} parent=1 // pred_check_branch
      %12 = sbr.rel (0) target = $region5
    $region4: #{tpu_custom_call.1} parent=1 // pred_region
      %s14 = ssub.s32 1024, 256
      %15 = vsyncadd [#allocation3], %s14
      %s16 = sshll.u32 [#allocation2], 4
      %s17 = int_to_ptr.vmem [resolvable:$true] %s16
      %22 = dma.hbm_to_vmem [thread:$0]  %s0, 256, %s17, [#allocation3], 256, 256, 16
    $region5: #{tpu_custom_call.1} parent=1 // pred_fallthru
      _
    // Predicated region
    $region6: #{tpu_custom_call.1} parent=1 // pred_check
      _
    $region7: #{tpu_custom_call.1} parent=1 // pred_check_branch
      %24 = sbr.rel (0) target = $region9
    $region8: #{tpu_custom_call.1} parent=1 // pred_region
      %s26 = ssub.s32 128, 128
      %27 = vsyncadd [#allocation6], %s26
      %s29 = sshll.u32 [#allocation5], 4
      %s30 = int_to_ptr.vmem [resolvable:$true] %s29
      %32 = dma.hbm_to_vmem [thread:$0]  %s1, 128, %s30, [#allocation6]
    $region9: #{tpu_custom_call.1} parent=1 // pred_fallthru
      _
    // Predicated region
    $region10: #{tpu_custom_call.1} parent=1 // pred_check
      _
    $region11: #{tpu_custom_call.1} parent=1 // pred_check_branch
      %34 = sbr.rel (0) target = $region13
    $region12: #{tpu_custom_call.1} parent=1 // pred_region
      %s36 = ssub.s32 128, 128
      %37 = vsyncadd [#allocation6], %s36
      %s39 = sshll.u32 [#allocation7], 4
      %s40 = int_to_ptr.vmem [resolvable:$true] %s39
      %42 = dma.hbm_to_vmem [thread:$0]  %s2, 128, %s40, [#allocation6]
    $region13: #{tpu_custom_call.1} parent=1 // pred_fallthru
      _
    // Predicated region
    $region14: #{tpu_custom_call.1} parent=1 // pred_check
      _
    $region15: #{tpu_custom_call.1} parent=1 // pred_check_branch
      %44 = sbr.rel (0) target = $region17
    $region16: #{tpu_custom_call.1} parent=1 // pred_region
      %45 = dma.done [#allocation3], 1024
    $region17: #{tpu_custom_call.1} parent=1 // pred_fallthru
      _
    // Predicated region
    $region18: #{tpu_custom_call.1} parent=1 // pred_check
      _
    $region19: #{tpu_custom_call.1} parent=1 // pred_check_branch
      %47 = sbr.rel (0) target = $region21
    $region20: #{tpu_custom_call.1} parent=1 // pred_region
      %48 = dma.done [#allocation6], 128
    $region21: #{tpu_custom_call.1} parent=1 // pred_fallthru
      _
    // Predicated region
    $region22: #{tpu_custom_call.1} parent=1 // pred_check
      _
    $region23: #{tpu_custom_call.1} parent=1 // pred_check_branch
      %50 = sbr.rel (0) target = $region25
    $region24: #{tpu_custom_call.1} parent=1 // pred_region
      %51 = dma.done [#allocation6], 128
    $region25: #{tpu_custom_call.1} parent=1 // pred_fallthru
      _
    %v52 = vld [vmem:[#allocation2] sm:$0xff]
    %v53 = vld [vmem:[#allocation2 + $0x8] sm:$0xff]
    %v54 = vld [vmem:[#allocation2 + $0x10] sm:$0xff]
    %v55 = vld [vmem:[#allocation2 + $0x18] sm:$0xff]
    %v56 = vld [vmem:[#allocation2 + $0x20] sm:$0xff]
    %v57 = vld [vmem:[#allocation2 + $0x28] sm:$0xff]
    %v58 = vld [vmem:[#allocation2 + $0x30] sm:$0xff]
    %v59 = vld [vmem:[#allocation2 + $0x38] sm:$0xff]
    %v68 = vcombine.low %v52, %v54
    %v69 = vcombine.high %v52, %v54
    %v70 = vcombine.low %v56, %v58
    %v71 = vcombine.high %v56, %v58
    %v73 = vunpack.c.l.s4 1983009808
    %v74 = vunpack.c.0.s8 %v73
    %v75 = vlaneseq
    %v76 = vshrl.u32 %v75, 7
    %v77 = vsub.s32 %v74, %v76
    %v78 = vrot.slane %v68, %v77
    %v80 = vunpack.c.l.s4 1983009808
    %v81 = vunpack.c.0.s8 %v80
    %v82 = vlaneseq
    %v83 = vshrl.u32 %v82, 7
    %v84 = vsub.s32 %v81, %v83
    %v85 = vrot.slane %v69, %v84
    %v87 = vunpack.c.l.s4 1983009808
    %v88 = vunpack.c.0.s8 %v87
    %v89 = vlaneseq
    %v90 = vshrl.u32 %v89, 7
    %v91 = vsub.s32 %v88, %v90
    %v92 = vrot.slane %v70, %v91
    %v94 = vunpack.c.l.s4 1983009808
    %v95 = vunpack.c.0.s8 %v94
    %v96 = vlaneseq
    %v97 = vshrl.u32 %v96, 7
    %v98 = vsub.s32 %v95, %v97
    %v99 = vrot.slane %v71, %v98
    %v100 = vcombine.low %v78, %v92
    %v101 = vcombine.high %v78, %v92
    %v102 = vcombine.low %v85, %v99
    %v103 = vcombine.high %v85, %v99
    %v104 = vcombine.low %v53, %v55
    %v105 = vcombine.high %v53, %v55
    %v106 = vcombine.low %v57, %v59
    %v107 = vcombine.high %v57, %v59
    %v109 = vunpack.c.l.s4 1983009808
    %v110 = vunpack.c.0.s8 %v109
    %v111 = vlaneseq
    %v112 = vshrl.u32 %v111, 7
    %v113 = vsub.s32 %v110, %v112
    %v114 = vrot.slane %v104, %v113
    %v116 = vunpack.c.l.s4 1983009808
    %v117 = vunpack.c.0.s8 %v116
    %v118 = vlaneseq
    %v119 = vshrl.u32 %v118, 7
    %v120 = vsub.s32 %v117, %v119
    %v121 = vrot.slane %v105, %v120
    %v123 = vunpack.c.l.s4 1983009808
    %v124 = vunpack.c.0.s8 %v123
    %v125 = vlaneseq
    %v126 = vshrl.u32 %v125, 7
    %v127 = vsub.s32 %v124, %v126
    %v128 = vrot.slane %v106, %v127
    %v130 = vunpack.c.l.s4 1983009808
    %v131 = vunpack.c.0.s8 %v130
    %v132 = vlaneseq
    %v133 = vshrl.u32 %v132, 7
    %v134 = vsub.s32 %v131, %v133
    %v135 = vrot.slane %v107, %v134
    %v136 = vcombine.low %v114, %v128
    %v137 = vcombine.high %v114, %v128
    %v138 = vcombine.low %v121, %v135
    %v139 = vcombine.high %v121, %v135
    %v148 = vadd.f32 %v100, %v101
    %v149 = vadd.f32 %v148, %v102
    %v150 = vadd.f32 %v149, %v103
    %v151 = vadd.f32 %v150, %v136
    %v152 = vadd.f32 %v151, %v137
    %v153 = vadd.f32 %v152, %v138
    %v154 = vadd.f32 %v153, %v139
    %155 = vadd.xlane.f32.xlu0 %v154
    %v156 = vpop.xlane.xlu0 %155
    %v157 = vmul.f32 %v156, 0.0009765625
    %v160 = vunpack.c.l.s4 269488144
    %v161 = vunpack.c.0.s8 %v160
    %v162 = vlaneseq
    %v163 = vshrl.u32 %v162, 7
    %v164 = vsub.s32 %v161, %v163
    %v165 = vrot.slane %v157, %v164
    %v167 = vunpack.c.l.s4 842150450
    %v168 = vunpack.c.0.s8 %v167
    %v169 = vlaneseq
    %v170 = vshrl.u32 %v169, 7
    %v171 = vsub.s32 %v168, %v170
    %v172 = vrot.slane %v157, %v171
    %v174 = vunpack.c.l.s4 1414812756
    %v175 = vunpack.c.0.s8 %v174
    %v176 = vlaneseq
    %v177 = vshrl.u32 %v176, 7
    %v178 = vsub.s32 %v175, %v177
    %v179 = vrot.slane %v157, %v178
    %v181 = vunpack.c.l.s4 1987475062
    %v182 = vunpack.c.0.s8 %v181
    %v183 = vlaneseq
    %v184 = vshrl.u32 %v183, 7
    %v185 = vsub.s32 %v182, %v184
    %v186 = vrot.slane %v157, %v185
    %v191 = vsub.f32 %v52, %v165
    %v192 = vsub.f32 %v53, %v165
    %v193 = vsub.f32 %v54, %v172
    %v194 = vsub.f32 %v55, %v172
    %v195 = vsub.f32 %v56, %v179
    %v196 = vsub.f32 %v57, %v179
    %v197 = vsub.f32 %v58, %v186
    %v198 = vsub.f32 %v59, %v186
    %v199 = vmul.f32 %v191, %v191
    %v200 = vmul.f32 %v192, %v192
    %v201 = vmul.f32 %v193, %v193
    %v202 = vmul.f32 %v194, %v194
    %v203 = vmul.f32 %v195, %v195
    %v204 = vmul.f32 %v196, %v196
    %v205 = vmul.f32 %v197, %v197
    %v206 = vmul.f32 %v198, %v198
    %v215 = vcombine.low %v199, %v201
    %v216 = vcombine.high %v199, %v201
    %v217 = vcombine.low %v203, %v205
    %v218 = vcombine.high %v203, %v205
    %v220 = vunpack.c.l.s4 1983009808
    %v221 = vunpack.c.0.s8 %v220
    %v222 = vlaneseq
    %v223 = vshrl.u32 %v222, 7
    %v224 = vsub.s32 %v221, %v223
    %v225 = vrot.slane %v215, %v224
    %v227 = vunpack.c.l.s4 1983009808
    %v228 = vunpack.c.0.s8 %v227
    %v229 = vlaneseq
    %v230 = vshrl.u32 %v229, 7
    %v231 = vsub.s32 %v228, %v230
    %v232 = vrot.slane %v216, %v231
    %v234 = vunpack.c.l.s4 1983009808
    %v235 = vunpack.c.0.s8 %v234
    %v236 = vlaneseq
    %v237 = vshrl.u32 %v236, 7
    %v238 = vsub.s32 %v235, %v237
    %v239 = vrot.slane %v217, %v238
    %v241 = vunpack.c.l.s4 1983009808
    %v242 = vunpack.c.0.s8 %v241
    %v243 = vlaneseq
    %v244 = vshrl.u32 %v243, 7
    %v245 = vsub.s32 %v242, %v244
    %v246 = vrot.slane %v218, %v245
    %v247 = vcombine.low %v225, %v239
    %v248 = vcombine.high %v225, %v239
    %v249 = vcombine.low %v232, %v246
    %v250 = vcombine.high %v232, %v246
    %v251 = vcombine.low %v200, %v202
    %v252 = vcombine.high %v200, %v202
    %v253 = vcombine.low %v204, %v206
    %v254 = vcombine.high %v204, %v206
    %v256 = vunpack.c.l.s4 1983009808
    %v257 = vunpack.c.0.s8 %v256
    %v258 = vlaneseq
    %v259 = vshrl.u32 %v258, 7
    %v260 = vsub.s32 %v257, %v259
    %v261 = vrot.slane %v251, %v260
    %v263 = vunpack.c.l.s4 1983009808
    %v264 = vunpack.c.0.s8 %v263
    %v265 = vlaneseq
    %v266 = vshrl.u32 %v265, 7
    %v267 = vsub.s32 %v264, %v266
    %v268 = vrot.slane %v252, %v267
    %v270 = vunpack.c.l.s4 1983009808
    %v271 = vunpack.c.0.s8 %v270
    %v272 = vlaneseq
    %v273 = vshrl.u32 %v272, 7
    %v274 = vsub.s32 %v271, %v273
    %v275 = vrot.slane %v253, %v274
    %v277 = vunpack.c.l.s4 1983009808
    %v278 = vunpack.c.0.s8 %v277
    %v279 = vlaneseq
    %v280 = vshrl.u32 %v279, 7
    %v281 = vsub.s32 %v278, %v280
    %v282 = vrot.slane %v254, %v281
    %v283 = vcombine.low %v261, %v275
    %v284 = vcombine.high %v261, %v275
    %v285 = vcombine.low %v268, %v282
    %v286 = vcombine.high %v268, %v282
    %v295 = vadd.f32 %v247, %v248
    %v296 = vadd.f32 %v295, %v249
    %v297 = vadd.f32 %v296, %v250
    %v298 = vadd.f32 %v297, %v283
    %v299 = vadd.f32 %v298, %v284
    %v300 = vadd.f32 %v299, %v285
    %v301 = vadd.f32 %v300, %v286
    %302 = vadd.xlane.f32.xlu0 %v301
    %v303 = vpop.xlane.xlu0 %302
    %v304 = vmul.f32 %v303, 0.0009775171
    %v305 = vrsqrt.pop %v304
    %v306 = vmul.f32 %v304, %v305
    %vm307 = vcmp.eq.f32.partialorder %v304, inf
    %v308 = vsel %vm307, %v304, %v306
    %vm309 = vcmp.eq.f32.partialorder %v304, 0.0
    %v310 = vand.u32 %v304, 2147483648
    %v311 = vsel %vm309, %v310, %v308
    %v312 = vadd.f32 %v311, 1e-05
    %v313 = vrcp.pop %v312
    %v316 = vunpack.c.l.s4 269488144
    %v317 = vunpack.c.0.s8 %v316
    %v318 = vlaneseq
    %v319 = vshrl.u32 %v318, 7
    %v320 = vsub.s32 %v317, %v319
    %v321 = vrot.slane %v313, %v320
    %v323 = vunpack.c.l.s4 842150450
    %v324 = vunpack.c.0.s8 %v323
    %v325 = vlaneseq
    %v326 = vshrl.u32 %v325, 7
    %v327 = vsub.s32 %v324, %v326
    %v328 = vrot.slane %v313, %v327
    %v330 = vunpack.c.l.s4 1414812756
    %v331 = vunpack.c.0.s8 %v330
    %v332 = vlaneseq
    %v333 = vshrl.u32 %v332, 7
    %v334 = vsub.s32 %v331, %v333
    %v335 = vrot.slane %v313, %v334
    %v337 = vunpack.c.l.s4 1987475062
    %v338 = vunpack.c.0.s8 %v337
    %v339 = vlaneseq
    %v340 = vshrl.u32 %v339, 7
    %v341 = vsub.s32 %v338, %v340
    %v342 = vrot.slane %v313, %v341
    %v347 = vmul.f32 %v191, %v321
    %v348 = vmul.f32 %v192, %v321
    %v349 = vmul.f32 %v193, %v328
    %v350 = vmul.f32 %v194, %v328
    %v351 = vmul.f32 %v195, %v335
    %v352 = vmul.f32 %v196, %v335
    %v353 = vmul.f32 %v197, %v342
    %v354 = vmul.f32 %v198, %v342
    %v355 = vld [vmem:[#allocation5] sm:$0xff]
    %v357 = vlaneseq
    %v358 = vshrl.u32 %v357, 7
    %v359 = vsub.s32 0, %v358
    %v360 = vrot.slane %v355, %v359
    %v361 = vlaneseq
    %v362 = vshrl.u32 %v361, 7
    %v363 = vsub.s32 1, %v362
    %v364 = vrot.slane %v355, %v363
    %v365 = vlaneseq
    %v366 = vshrl.u32 %v365, 7
    %v367 = vsub.s32 2, %v366
    %v368 = vrot.slane %v355, %v367
    %v369 = vlaneseq
    %v370 = vshrl.u32 %v369, 7
    %v371 = vsub.s32 3, %v370
    %v372 = vrot.slane %v355, %v371
    %v373 = vlaneseq
    %v374 = vshrl.u32 %v373, 7
    %v375 = vsub.s32 4, %v374
    %v376 = vrot.slane %v355, %v375
    %v377 = vlaneseq
    %v378 = vshrl.u32 %v377, 7
    %v379 = vsub.s32 5, %v378
    %v380 = vrot.slane %v355, %v379
    %v381 = vlaneseq
    %v382 = vshrl.u32 %v381, 7
    %v383 = vsub.s32 6, %v382
    %v384 = vrot.slane %v355, %v383
    %v385 = vlaneseq
    %v386 = vshrl.u32 %v385, 7
    %v387 = vsub.s32 7, %v386
    %v388 = vrot.slane %v355, %v387
    %v405 = vcombine.low %v347, %v349
    %v406 = vcombine.high %v347, %v349
    %v407 = vcombine.low %v351, %v353
    %v408 = vcombine.high %v351, %v353
    %v410 = vunpack.c.l.s4 1983009808
    %v411 = vunpack.c.0.s8 %v410
    %v412 = vlaneseq
    %v413 = vshrl.u32 %v412, 7
    %v414 = vsub.s32 %v411, %v413
    %v415 = vrot.slane %v405, %v414
    %v417 = vunpack.c.l.s4 1983009808
    %v418 = vunpack.c.0.s8 %v417
    %v419 = vlaneseq
    %v420 = vshrl.u32 %v419, 7
    %v421 = vsub.s32 %v418, %v420
    %v422 = vrot.slane %v406, %v421
    %v424 = vunpack.c.l.s4 1983009808
    %v425 = vunpack.c.0.s8 %v424
    %v426 = vlaneseq
    %v427 = vshrl.u32 %v426, 7
    %v428 = vsub.s32 %v425, %v427
    %v429 = vrot.slane %v407, %v428
    %v431 = vunpack.c.l.s4 1983009808
    %v432 = vunpack.c.0.s8 %v431
    %v433 = vlaneseq
    %v434 = vshrl.u32 %v433, 7
    %v435 = vsub.s32 %v432, %v434
    %v436 = vrot.slane %v408, %v435
    %v437 = vcombine.low %v415, %v429
    %v438 = vcombine.high %v415, %v429
    %v439 = vcombine.low %v422, %v436
    %v440 = vcombine.high %v422, %v436
    %v441 = vcombine.low %v348, %v350
    %v442 = vcombine.high %v348, %v350
    %v443 = vcombine.low %v352, %v354
    %v444 = vcombine.high %v352, %v354
    %v446 = vunpack.c.l.s4 1983009808
    %v447 = vunpack.c.0.s8 %v446
    %v448 = vlaneseq
    %v449 = vshrl.u32 %v448, 7
    %v450 = vsub.s32 %v447, %v449
    %v451 = vrot.slane %v441, %v450
    %v453 = vunpack.c.l.s4 1983009808
    %v454 = vunpack.c.0.s8 %v453
    %v455 = vlaneseq
    %v456 = vshrl.u32 %v455, 7
    %v457 = vsub.s32 %v454, %v456
    %v458 = vrot.slane %v442, %v457
    %v460 = vunpack.c.l.s4 1983009808
    %v461 = vunpack.c.0.s8 %v460
    %v462 = vlaneseq
    %v463 = vshrl.u32 %v462, 7
    %v464 = vsub.s32 %v461, %v463
    %v465 = vrot.slane %v443, %v464
    %v467 = vunpack.c.l.s4 1983009808
    %v468 = vunpack.c.0.s8 %v467
    %v469 = vlaneseq
    %v470 = vshrl.u32 %v469, 7
    %v471 = vsub.s32 %v468, %v470
    %v472 = vrot.slane %v444, %v471
    %v473 = vcombine.low %v451, %v465
    %v474 = vcombine.high %v451, %v465
    %v475 = vcombine.low %v458, %v472
    %v476 = vcombine.high %v458, %v472
    %v485 = vmul.f32 %v360, %v437
    %v486 = vmul.f32 %v364, %v438
    %v487 = vmul.f32 %v368, %v439
    %v488 = vmul.f32 %v372, %v440
    %v489 = vmul.f32 %v376, %v473
    %v490 = vmul.f32 %v380, %v474
    %v491 = vmul.f32 %v384, %v475
    %v492 = vmul.f32 %v388, %v476
    %v493 = vld [vmem:[#allocation7] sm:$0xff]
    %v495 = vlaneseq
    %v496 = vshrl.u32 %v495, 7
    %v497 = vsub.s32 0, %v496
    %v498 = vrot.slane %v493, %v497
    %v499 = vlaneseq
    %v500 = vshrl.u32 %v499, 7
    %v501 = vsub.s32 1, %v500
    %v502 = vrot.slane %v493, %v501
    %v503 = vlaneseq
    %v504 = vshrl.u32 %v503, 7
    %v505 = vsub.s32 2, %v504
    %v506 = vrot.slane %v493, %v505
    %v507 = vlaneseq
    %v508 = vshrl.u32 %v507, 7
    %v509 = vsub.s32 3, %v508
    %v510 = vrot.slane %v493, %v509
    %v511 = vlaneseq
    %v512 = vshrl.u32 %v511, 7
    %v513 = vsub.s32 4, %v512
    %v514 = vrot.slane %v493, %v513
    %v515 = vlaneseq
    %v516 = vshrl.u32 %v515, 7
    %v517 = vsub.s32 5, %v516
    %v518 = vrot.slane %v493, %v517
    %v519 = vlaneseq
    %v520 = vshrl.u32 %v519, 7
    %v521 = vsub.s32 6, %v520
    %v522 = vrot.slane %v493, %v521
    %v523 = vlaneseq
    %v524 = vshrl.u32 %v523, 7
    %v525 = vsub.s32 7, %v524
    %v526 = vrot.slane %v493, %v525
    %v535 = vadd.f32 %v485, %v498
    %v536 = vadd.f32 %v486, %v502
    %v537 = vadd.f32 %v487, %v506
    %v538 = vadd.f32 %v488, %v510
    %v539 = vadd.f32 %v489, %v514
    %v540 = vadd.f32 %v490, %v518
    %v541 = vadd.f32 %v491, %v522
    %v542 = vadd.f32 %v492, %v526
    %v551 = vcombine.low %v535, %v536
    %v552 = vcombine.high %v535, %v536
    %v553 = vcombine.low %v537, %v538
    %v554 = vcombine.high %v537, %v538
    %v556 = vunpack.c.l.s4 1983009808
    %v557 = vunpack.c.0.s8 %v556
    %v558 = vlaneseq
    %v559 = vshrl.u32 %v558, 7
    %v560 = vsub.s32 %v557, %v559
    %v561 = vrot.slane %v551, %v560
    %v563 = vunpack.c.l.s4 1983009808
    %v564 = vunpack.c.0.s8 %v563
    %v565 = vlaneseq
    %v566 = vshrl.u32 %v565, 7
    %v567 = vsub.s32 %v564, %v566
    %v568 = vrot.slane %v552, %v567
    %v570 = vunpack.c.l.s4 1983009808
    %v571 = vunpack.c.0.s8 %v570
    %v572 = vlaneseq
    %v573 = vshrl.u32 %v572, 7
    %v574 = vsub.s32 %v571, %v573
    %v575 = vrot.slane %v553, %v574
    %v577 = vunpack.c.l.s4 1983009808
    %v578 = vunpack.c.0.s8 %v577
    %v579 = vlaneseq
    %v580 = vshrl.u32 %v579, 7
    %v581 = vsub.s32 %v578, %v580
    %v582 = vrot.slane %v554, %v581
    %v583 = vcombine.low %v561, %v575
    %v584 = vcombine.high %v561, %v575
    %v585 = vcombine.low %v568, %v582
    %v586 = vcombine.high %v568, %v582
    %v587 = vcombine.low %v539, %v540
    %v588 = vcombine.high %v539, %v540
    %v589 = vcombine.low %v541, %v542
    %v590 = vcombine.high %v541, %v542
    %v592 = vunpack.c.l.s4 1983009808
    %v593 = vunpack.c.0.s8 %v592
    %v594 = vlaneseq
    %v595 = vshrl.u32 %v594, 7
    %v596 = vsub.s32 %v593, %v595
    %v597 = vrot.slane %v587, %v596
    %v599 = vunpack.c.l.s4 1983009808
    %v600 = vunpack.c.0.s8 %v599
    %v601 = vlaneseq
    %v602 = vshrl.u32 %v601, 7
    %v603 = vsub.s32 %v600, %v602
    %v604 = vrot.slane %v588, %v603
    %v606 = vunpack.c.l.s4 1983009808
    %v607 = vunpack.c.0.s8 %v606
    %v608 = vlaneseq
    %v609 = vshrl.u32 %v608, 7
    %v610 = vsub.s32 %v607, %v609
    %v611 = vrot.slane %v589, %v610
    %v613 = vunpack.c.l.s4 1983009808
    %v614 = vunpack.c.0.s8 %v613
    %v615 = vlaneseq
    %v616 = vshrl.u32 %v615, 7
    %v617 = vsub.s32 %v614, %v616
    %v618 = vrot.slane %v590, %v617
    %v619 = vcombine.low %v597, %v611
    %v620 = vcombine.high %v597, %v611
    %v621 = vcombine.low %v604, %v618
    %v622 = vcombine.high %v604, %v618
    %631 = vst [vmem:[#allocation8] sm:$0xff] %v583
    %632 = vst [vmem:[#allocation8 + $0x8] sm:$0xff] %v619
    %633 = vst [vmem:[#allocation8 + $0x10] sm:$0xff] %v584
    %634 = vst [vmem:[#allocation8 + $0x18] sm:$0xff] %v620
    %635 = vst [vmem:[#allocation8 + $0x20] sm:$0xff] %v585
    %636 = vst [vmem:[#allocation8 + $0x28] sm:$0xff] %v621
    %637 = vst [vmem:[#allocation8 + $0x30] sm:$0xff] %v586
    %638 = vst [vmem:[#allocation8 + $0x38] sm:$0xff] %v622
    // Predicated region
    $region26: #{tpu_custom_call.1} parent=1 // pred_check
      _
    $region27: #{tpu_custom_call.1} parent=1 // pred_check_branch
      %640 = sbr.rel (0) target = $region29
    $region28: #{tpu_custom_call.1} parent=1 // pred_region
      %s642 = ssub.s32 1024, 256
      %643 = vsyncadd [#allocation4], %s642
      %s644 = sshll.u32 [#allocation8], 4
      %s645 = int_to_ptr.vmem [resolvable:$true] %s644
      %650 = dma.vmem_to_hbm [thread:$0]  %s645, 256, %s3, [#allocation4], 256, 256, 16
    $region29: #{tpu_custom_call.1} parent=1 // pred_fallthru
      _
    // Predicated region
    $region30: #{tpu_custom_call.1} parent=1 // pred_check
      _
    $region31: #{tpu_custom_call.1} parent=1 // pred_check_branch
      %652 = sbr.rel (0) target = $region33
    $region32: #{tpu_custom_call.1} parent=1 // pred_region
      %653 = dma.done [#allocation4], 1024
    $region33: #{tpu_custom_call.1} parent=1 // pred_fallthru
      _
    %654 = vsyncpa [#allocation3], 1
    %655 = vsyncpa [#allocation6], 1
    %656 = vsyncpa [#allocation4], 1

</llo_original>
